<compile_context>
chip_gen: v5e
topology: v5e:2x2
jax: 0.10.0
libtpu: 0.0.40
codegen_flags: <defaults>
</compile_context>

<pallas_src>
import jax
import jax.numpy as jnp
from jax.experimental import pallas as pl
from jax.experimental.pallas import tpu as pltpu


def _shuffle_kernel(x_ref, o_ref):
    """In-VMEM group interleave.

    x_ref: (1, g, tc, HW)  block of x viewed as (N, g, cpg, HW)
    o_ref: (1, tc, g*HW)   block of out viewed as (N, cpg, g*HW)

    o[0, r, j*HW + p] = x[0, j, r, p]
    """
    g = x_ref.shape[1]
    hw = x_ref.shape[3]
    # g is small and static -> unrolled at trace time; all slices are static.
    for j in range(g):
        o_ref[0, :, j * hw:(j + 1) * hw] = x_ref[0, j, :, :]


def _pick_cpg_tile(cpg: int, g: int, hw: int, itemsize: int, n_batch: int,
                   budget_bytes: int = 24 * 1024 * 1024,
                   min_steps: int = 16) -> int:
    """Pick the channels-per-group tile size.

    Candidates are divisors of cpg that are either == cpg (full extent) or a
    multiple of 8 (sublane aligned), so every block shape is legal.  Prefer
    the largest tile whose double-buffered in+out footprint fits the VMEM
    budget; among those, prefer one that still yields >= min_steps grid steps
    (keeps the pipeline / both v7x TensorCores fed).
    """
    cands = [d for d in range(1, cpg + 1)
             if cpg % d == 0 and (d == cpg or d % 8 == 0)]
    cands.sort(reverse=True)
    per_row = 4 * g * hw * itemsize          # 2 bufs * (in + out) per cpg row
    fitting = [d for d in cands if d * per_row <= budget_bytes]
    if not fitting:
        # Extreme shapes: take the smallest legal tile and let the caller
        # raise the VMEM limit accordingly.
        return cands[-1]
    for d in fitting:                         # descending: largest first
        if n_batch * (cpg // d) >= min_steps:
            return d
    return fitting[0]                         # min_steps unreachable: go big


def channel_shuffle(x: jax.Array, groups: int) -> jax.Array:
    N, C, H, W = x.shape
    g = groups
    assert C % g == 0, (
        f"Incompatible group size {g} for input channel {C}")
    cpg = C // g
    HW = H * W
    itemsize = x.dtype.itemsize

    # Free contiguous reshape: channel c = j*cpg + i  ->  (g, cpg) split.
    x4 = x.reshape(N, g, cpg, HW)

    tc = _pick_cpg_tile(cpg, g, HW, itemsize, N)
    nc = cpg // tc

    block_bytes = 4 * g * tc * HW * itemsize          # double-buffered in+out
    vmem_limit = max(32 * 1024 * 1024, block_bytes + 8 * 1024 * 1024)

    out3 = pl.pallas_call(
        _shuffle_kernel,
        out_shape=jax.ShapeDtypeStruct((N, cpg, g * HW), x.dtype),
        grid_spec=pltpu.PrefetchScalarGridSpec(
            num_scalar_prefetch=0,
            grid=(N, nc),
            in_specs=[
                # (g, tc, HW): HW is full extent -> no 128-multiple constraint,
                # tc is cpg (full) or a multiple of 8.
                pl.BlockSpec((1, g, tc, HW), lambda n, c: (n, 0, c, 0)),
            ],
            # Fully contiguous (tc, g*HW) output slab per step.
            out_specs=pl.BlockSpec((1, tc, g * HW), lambda n, c: (n, c, 0)),
        ),
        compiler_params=pltpu.CompilerParams(
            dimension_semantics=("parallel", "parallel"),
            vmem_limit_bytes=vmem_limit),
        cost_estimate=pl.CostEstimate(
            flops=0, transcendentals=0,
            bytes_accessed=2 * N * C * HW * itemsize),
    )(x4)

    # out3[n, i, j*HW + p] == x[n, j*cpg + i, p] == y[n, i*g + j, p];
    # contiguous reshape back to NCHW: no transpose, no pad, no slice.
    return out3.reshape(N, C, H, W)


def channel_shuffle_ref(x: jax.Array, groups: int) -> jax.Array:
    """Pure-JAX reference mirroring the PyTorch view/permute/view sequence."""
    N, C, H, W = x.shape
    g = groups
    return (x.reshape(N, g, C // g, H, W)
             .transpose(0, 2, 1, 3, 4)
             .reshape(N, C, H, W))


if __name__ == "__main__":
    key = jax.random.PRNGKey(0)
    N, C, H, W = 2, 8, 16, 16
    groups = 4
    x = jax.random.normal(key, (N, C, H, W), dtype=jnp.float32)

    out = jax.block_until_ready(channel_shuffle(x, groups))

    ref = channel_shuffle_ref(x, groups)
    assert out.shape == ref.shape and out.dtype == ref.dtype
    assert jnp.array_equal(out, ref), "Pallas channel shuffle mismatch"

    print("KERNEL_OK")
</pallas_src>

<mosaic_0001>
module attributes {stable_mosaic.version = 11 : i64} {
  func.func @_shuffle_kernel(%arg0: i32, %arg1: i32, %arg2: memref<1x4x2x256xf32, #tpu.memory_space<vmem>>, %arg3: memref<1x2x1024xf32, #tpu.memory_space<vmem>>) attributes {dimension_semantics = [#tpu.dimension_semantics<parallel>, #tpu.dimension_semantics<parallel>], iteration_bounds = array<i64: 2, 1>, scalar_prefetch = 0 : i64, scratch_operands = 0 : i64, tpu.core_type = #tpu.core_type<tc>, window_params = [{transform_indices = @transform_0, window_bounds = array<i64: 1, 4, 2, 256>}, {transform_indices = @transform_1, window_bounds = array<i64: 1, 2, 1024>}]} {
    %c0 = arith.constant 0 : index
    %c0_0 = arith.constant 0 : index
    %c0_1 = arith.constant 0 : index
    %c0_2 = arith.constant 0 : index
    %0 = vector.load %arg2[%c0, %c0_0, %c0_1, %c0_2] : memref<1x4x2x256xf32, #tpu.memory_space<vmem>>, vector<1x1x2x256xf32>
    %1 = vector.shape_cast %0 : vector<1x1x2x256xf32> to vector<2x256xf32>
    %c0_3 = arith.constant 0 : index
    %c0_4 = arith.constant 0 : index
    %c0_5 = arith.constant 0 : index
    %2 = vector.load %arg3[%c0_3, %c0_4, %c0_5] : memref<1x2x1024xf32, #tpu.memory_space<vmem>>, vector<1x2x256xf32>
    %3 = vector.shape_cast %2 : vector<1x2x256xf32> to vector<2x256xf32>
    %4 = vector.shape_cast %1 : vector<2x256xf32> to vector<1x2x256xf32>
    tpu.vector_store %arg3[%c0_3, %c0_4, %c0_5], %4 {strides = array<i32>} : memref<1x2x1024xf32, #tpu.memory_space<vmem>>, vector<1x2x256xf32>,
    %c0_6 = arith.constant 0 : index
    %c1 = arith.constant 1 : index
    %c0_7 = arith.constant 0 : index
    %c0_8 = arith.constant 0 : index
    %5 = vector.load %arg2[%c0_6, %c1, %c0_7, %c0_8] : memref<1x4x2x256xf32, #tpu.memory_space<vmem>>, vector<1x1x2x256xf32>
    %6 = vector.shape_cast %5 : vector<1x1x2x256xf32> to vector<2x256xf32>
    %c0_9 = arith.constant 0 : index
    %c0_10 = arith.constant 0 : index
    %c256 = arith.constant 256 : index
    %7 = vector.load %arg3[%c0_9, %c0_10, %c256] : memref<1x2x1024xf32, #tpu.memory_space<vmem>>, vector<1x2x256xf32>
    %8 = vector.shape_cast %7 : vector<1x2x256xf32> to vector<2x256xf32>
    %9 = vector.shape_cast %6 : vector<2x256xf32> to vector<1x2x256xf32>
    tpu.vector_store %arg3[%c0_9, %c0_10, %c256], %9 {strides = array<i32>} : memref<1x2x1024xf32, #tpu.memory_space<vmem>>, vector<1x2x256xf32>,
    %c0_11 = arith.constant 0 : index
    %c2 = arith.constant 2 : index
    %c0_12 = arith.constant 0 : index
    %c0_13 = arith.constant 0 : index
    %10 = vector.load %arg2[%c0_11, %c2, %c0_12, %c0_13] : memref<1x4x2x256xf32, #tpu.memory_space<vmem>>, vector<1x1x2x256xf32>
    %11 = vector.shape_cast %10 : vector<1x1x2x256xf32> to vector<2x256xf32>
    %c0_14 = arith.constant 0 : index
    %c0_15 = arith.constant 0 : index
    %c512 = arith.constant 512 : index
    %12 = vector.load %arg3[%c0_14, %c0_15, %c512] : memref<1x2x1024xf32, #tpu.memory_space<vmem>>, vector<1x2x256xf32>
    %13 = vector.shape_cast %12 : vector<1x2x256xf32> to vector<2x256xf32>
    %14 = vector.shape_cast %11 : vector<2x256xf32> to vector<1x2x256xf32>
    tpu.vector_store %arg3[%c0_14, %c0_15, %c512], %14 {strides = array<i32>} : memref<1x2x1024xf32, #tpu.memory_space<vmem>>, vector<1x2x256xf32>,
    %c0_16 = arith.constant 0 : index
    %c3 = arith.constant 3 : index
    %c0_17 = arith.constant 0 : index
    %c0_18 = arith.constant 0 : index
    %15 = vector.load %arg2[%c0_16, %c3, %c0_17, %c0_18] : memref<1x4x2x256xf32, #tpu.memory_space<vmem>>, vector<1x1x2x256xf32>
    %16 = vector.shape_cast %15 : vector<1x1x2x256xf32> to vector<2x256xf32>
    %c0_19 = arith.constant 0 : index
    %c0_20 = arith.constant 0 : index
    %c768 = arith.constant 768 : index
    %17 = vector.load %arg3[%c0_19, %c0_20, %c768] : memref<1x2x1024xf32, #tpu.memory_space<vmem>>, vector<1x2x256xf32>
    %18 = vector.shape_cast %17 : vector<1x2x256xf32> to vector<2x256xf32>
    %19 = vector.shape_cast %16 : vector<2x256xf32> to vector<1x2x256xf32>
    tpu.vector_store %arg3[%c0_19, %c0_20, %c768], %19 {strides = array<i32>} : memref<1x2x1024xf32, #tpu.memory_space<vmem>>, vector<1x2x256xf32>,
    return
  }
  func.func @transform_0(%arg0: i32, %arg1: i32) -> (i32, i32, i32, i32) {
    %c0_i32 = arith.constant 0 : i32
    %c0_i32_0 = arith.constant 0 : i32
    %c0_i32_1 = arith.constant 0 : i32
    return %arg0, %c0_i32, %arg1, %c0_i32_0 : i32, i32, i32, i32
  }
  func.func @transform_1(%arg0: i32, %arg1: i32) -> (i32, i32, i32) {
    %c0_i32 = arith.constant 0 : i32
    %c0_i32_0 = arith.constant 0 : i32
    return %arg0, %arg1, %c0_i32 : i32, i32, i32
  }
}

</mosaic_0001>

<llo_original>
// kernel: tpu_custom_call.1
$region0: #{tpu_custom_call.1}
  #allocation0 [shape = 'u32[]', space=smem, size = 0x4, offset = 0x4, fixed_abs, tag = 'smem constant byte address 0x4 - core index']
  #allocation1 [shape = 'u32[72,128]{1,0:T(1,128)}', space=vmem, size = 0x9000, scoped, tag = 'internal scratch']
  %s0 = inlined_call_operand.hbm [shape: f32[2,4,2,256], index: 0, kind: input, shape index: {}]
  %s1 = inlined_call_operand.hbm [shape: f32[2,2,1024], index: 1, kind: output, shape index: {}]
  %s2 = sld [smem:[#allocation0]]
  $region41: #{tpu_custom_call.1} parent=0
    _
  %s4 = ssub.s32 1, %s2
  %s5 = scalar_select 0, %s4, %s2
  $region1: #{tpu_custom_call.1} parent=0
    #allocation2 [shape = 'u8[16384]{0}', space=vmem, size = 0x4000, scoped, tag = 'input window, operand 0']
    #allocation3 [shape = 's32[2]{0}', space=sflag, size = 0x8, scoped, tag = 'scoped memory for tpu_custom_call.1']
    #allocation4 [shape = 's32[2]{0}', space=sflag, size = 0x8, scoped, tag = 'scoped memory for tpu_custom_call.1']
    #allocation5 [shape = 'u8[16384]{0}', space=vmem, size = 0x4000, scoped, tag = 'output window, operand 0']
    %6 = vsyncpa [#allocation3], 0
    %s7 = scalar_lea.sflag [#allocation3], 1
    %8 = vsyncpa %s7, 0
    %9 = vsyncpa [#allocation4], 0
    %s10 = scalar_lea.sflag [#allocation4], 1
    %11 = vsyncpa %s10, 0
    loop: start=0, step=1, limit=4
    $region2: #{tpu_custom_call.1} parent=1 // loop_pre_header
      _
    $region3: #{tpu_custom_call.1} parent=1 // loop_header
      %s13 = sphi 0, %s17
      %p14 = scmp.ge.s32.totalorder %s13, 4
      %s20 = sphi 0, %s32
      %s21 = sphi 0, %s28
      %s22 = sphi 0, %s20
      %s23 = sphi 0, %s21
      %s24 = sphi 0, %s22
      %s25 = sphi 0, %s23
      %s37 = sphi 0, %s39
      %s40 = sphi 0, %s37
      %s41 = sphi 0, %s40
      %s57 = sphi 0, %s41
      %s65 = sphi 0, %s67
      %s68 = sphi 0, %s65
      %s69 = sphi 0, %s68
      %s85 = sphi 0, %s69
    $region4: #{tpu_custom_call.1} parent=1 // loop_header_branch
      %16 = sbr.rel (%p14) target = $region8
    $region5: #{tpu_custom_call.1} parent=1 // loop_body
      %s18 = ssub.s32 %s13, 1
      %s19 = ssub.s32 %s13, 2
      %s26 = sadd.s32 1, %s21
      %p27 = scmp.ge.s32.totalorder %s26, 1
      %s28 = scalar_select %p27, 0, %s26
      %s29 = sadd.s32 1, %s20
      %s30 = scalar_select %p27, %s29, %s20
      %p31 = scmp.ge.s32.totalorder %s30, 2
      %s32 = scalar_select %p31, 0, %s30
      %s33 = ssub.s32 %s20, %s32
      %s34 = ssub.s32 %s21, %s28
      %s35 = sor.u32 %s33, %s34
      %p36 = scmp.eq.s32.totalorder %s35, 0
      %s38 = sadd.s32 %s37, 1
      %s39 = scalar_select %p36, %s37, %s38
      %p42 = pneg %p36
      %p43 = scmp.eq.s32.totalorder %s13, 1
      %p44 = por %p42, %p43
      %p45 = scmp.ne.s32.totalorder %s37, %s40
      %p46 = scmp.eq.s32.totalorder %s13, 0
      %p47 = por %p45, %p46
      %p48 = scmp.ne.s32.totalorder %s37, %s40
      %p49 = scmp.eq.s32.totalorder %s18, 1
      %p50 = por %p48, %p49
      %p51 = scmp.ne.s32.totalorder %s40, %s41
      %p52 = scmp.eq.s32.totalorder %s18, 0
      %p53 = por %p51, %p52
      %p54 = scmp.ne.s32.totalorder %s40, %s41
      %p55 = scmp.eq.s32.totalorder %s19, 1
      %p56 = por %p54, %p55
      %p58 = scmp.ne.s32.totalorder %s41, %s57
      %p59 = scmp.eq.s32.totalorder %s19, 0
      %p60 = por %p58, %p59
      %s61 = ssub.s32 %s20, %s32
      %s62 = ssub.s32 %s21, %s28
      %s63 = sor.u32 %s61, %s62
      %p64 = scmp.eq.s32.totalorder %s63, 0
      %s66 = sadd.s32 %s65, 1
      %s67 = scalar_select %p64, %s65, %s66
      %p70 = pneg %p64
      %p71 = scmp.eq.s32.totalorder %s13, 1
      %p72 = por %p70, %p71
      %p73 = scmp.ne.s32.totalorder %s65, %s68
      %p74 = scmp.eq.s32.totalorder %s13, 0
      %p75 = por %p73, %p74
      %p76 = scmp.ne.s32.totalorder %s65, %s68
      %p77 = scmp.eq.s32.totalorder %s18, 1
      %p78 = por %p76, %p77
      %p79 = scmp.ne.s32.totalorder %s68, %s69
      %p80 = scmp.eq.s32.totalorder %s18, 0
      %p81 = por %p79, %p80
      %p82 = scmp.ne.s32.totalorder %s68, %s69
      %p83 = scmp.eq.s32.totalorder %s19, 1
      %p84 = por %p82, %p83
      %p86 = scmp.ne.s32.totalorder %s69, %s85
      %p87 = scmp.eq.s32.totalorder %s19, 0
      %p88 = por %p86, %p87
      %p89 = scmp.le.s32.totalorder 1, %s13
      %p90 = scmp.lt.s32.totalorder %s13, 3
      %p91 = pnand %p89, %p90
      %p92 = pneg %p91
      // Predicated region
      $region9: #{tpu_custom_call.1} parent=5 // pred_check
        _
      $region10: #{tpu_custom_call.1} parent=5 // pred_check_branch
        %94 = sbr.rel (%p91) target = $region12
      $region11: #{tpu_custom_call.1} parent=5 // pred_region
        %s95 = ssub.s32 %s13, 1
      $region12: #{tpu_custom_call.1} parent=5 // pred_fallthru
        _
      %p96 = scmp.lt.s32.totalorder %s13, 2
      // Predicated region
      $region13: #{tpu_custom_call.1} parent=5 // pred_check
        %p97 = pneg %p96
      $region14: #{tpu_custom_call.1} parent=5 // pred_check_branch
        %99 = sbr.rel (%p97) target = $region16
      $region15: #{tpu_custom_call.1} parent=5 // pred_region
        // Predicated region
        $region17: #{tpu_custom_call.1} parent=15 // pred_check
          %p100 = pneg %p47
        $region18: #{tpu_custom_call.1} parent=15 // pred_check_branch
          %102 = sbr.rel (%p100) target = $region20
        $region19: #{tpu_custom_call.1} parent=15 // pred_region
          %s103 = sand.u32 %s37, 1
          %s104 = scalar_lea.sflag [#allocation3], %s103
          %s105 = sand.u32 %s37, 1
          %s106 = smul.addr %s105, 16
          %s107 = scalar_lea.vmem [#allocation2], %s106
          %109 = vsyncadd %s104, 0
          %s110 = smul.addr %s21, 2
          %s111 = smul.addr %s20, 8
          %s112 = sadd.s32 %s110, %s111
          %s113 = smul.addr %s112, 2
          %s114 = scalar_lea.hbm %s0, %s113
          %s115 = sshll.u32 %s114, 4
          %s116 = int_to_ptr.hbm [resolvable:$true] %s115
          %s117 = sshll.u32 %s107, 4
          %s118 = int_to_ptr.vmem [resolvable:$true] %s117
          %123 = dma.hbm_to_vmem [thread:$0]  %s116, 256, %s118, %s104, 64, 64, 4
        $region20: #{tpu_custom_call.1} parent=15 // pred_fallthru
          _
      $region16: #{tpu_custom_call.1} parent=5 // pred_fallthru
        _
      %p124 = scmp.le.s32.totalorder 1, %s13
      %p125 = scmp.lt.s32.totalorder %s13, 3
      %p126 = pnand %p124, %p125
      %p127 = pneg %p126
      // Predicated region
      $region21: #{tpu_custom_call.1} parent=5 // pred_check
        _
      $region22: #{tpu_custom_call.1} parent=5 // pred_check_branch
        %129 = sbr.rel (%p126) target = $region24
      $region23: #{tpu_custom_call.1} parent=5 // pred_region
        %s130 = ssub.s32 %s13, 1
        %s131 = sand.u32 %s40, 1
        %s132 = scalar_lea.sflag [#allocation3], %s131
        %s133 = sand.u32 %s40, 1
        %s134 = smul.addr %s133, 16
        %s135 = scalar_lea.vmem [#allocation2], %s134
        // Predicated region
        $region25: #{tpu_custom_call.1} parent=23 // pred_check
          %p136 = pneg %p53
        $region26: #{tpu_custom_call.1} parent=23 // pred_check_branch
          %138 = sbr.rel (%p136) target = $region28
        $region27: #{tpu_custom_call.1} parent=23 // pred_region
          %140 = dma.done %s132, 256
        $region28: #{tpu_custom_call.1} parent=23 // pred_fallthru
          _
        %s141 = sand.u32 %s40, 1
        %s142 = scalar_lea.sflag [#allocation3], %s141
        %s143 = sand.u32 %s40, 1
        %s144 = smul.addr %s143, 16
        %s145 = scalar_lea.vmem [#allocation2], %s144
        %p146 = pneg %p53
        %p147 = pneg %p50
        %p148 = pneg %p81
        %p149 = pneg %p78
        %s150 = sand.u32 %s68, 1
        %s151 = scalar_lea.sflag [#allocation4], %s150
        %s152 = sand.u32 %s68, 1
        %s153 = smul.addr %s152, 16
        %s154 = scalar_lea.vmem [#allocation5], %s153
        %v155 = vld [vmem:[%s135] sm:$0xf]
        %156 = vst [vmem:[%s154] sm:$0xf] %v155
        %s157 = scalar_lea.vmem %s135, 4 [#allocation2]
        %v158 = vld [vmem:[%s157] sm:$0xf]
        %159 = vst [vmem:[%s154 + $0x4] sm:$0xf] %v158
        %s160 = scalar_lea.vmem %s135, 8 [#allocation2]
        %v161 = vld [vmem:[%s160] sm:$0xf]
        %162 = vst [vmem:[%s154 + $0x8] sm:$0xf] %v161
        %s163 = scalar_lea.vmem %s135, 12 [#allocation2]
        %v164 = vld [vmem:[%s163] sm:$0xf]
        %165 = vst [vmem:[%s154 + $0xc] sm:$0xf] %v164
        %s166 = sand.u32 %s68, 1
        %s167 = scalar_lea.sflag [#allocation4], %s166
        %s168 = sand.u32 %s68, 1
        %s169 = smul.addr %s168, 16
        %s170 = scalar_lea.vmem [#allocation5], %s169
        // Predicated region
        $region29: #{tpu_custom_call.1} parent=23 // pred_check
          %p171 = pneg %p78
        $region30: #{tpu_custom_call.1} parent=23 // pred_check_branch
          %173 = sbr.rel (%p171) target = $region32
        $region31: #{tpu_custom_call.1} parent=23 // pred_region
          %175 = vsyncadd %s167, 0
          %s176 = smul.addr %s23, 8
          %s177 = smul.addr %s22, 8
          %s178 = sadd.s32 %s176, %s177
          %s179 = smul.addr %s178, 2
          %s180 = scalar_lea.hbm %s1, %s179
          %s182 = sshll.u32 %s170, 4
          %s183 = int_to_ptr.vmem [resolvable:$true] %s182
          %s184 = sshll.u32 %s180, 4
          %s185 = int_to_ptr.hbm [resolvable:$true] %s184
          %187 = dma.vmem_to_hbm [thread:$0]  %s183, 256, %s185, %s167
        $region32: #{tpu_custom_call.1} parent=23 // pred_fallthru
          _
      $region24: #{tpu_custom_call.1} parent=5 // pred_fallthru
        _
      %p188 = scmp.le.s32.totalorder 2, %s13
      // Predicated region
      $region33: #{tpu_custom_call.1} parent=5 // pred_check
        %p189 = pneg %p188
      $region34: #{tpu_custom_call.1} parent=5 // pred_check_branch
        %191 = sbr.rel (%p189) target = $region36
      $region35: #{tpu_custom_call.1} parent=5 // pred_region
        %s192 = ssub.s32 %s13, 2
        // Predicated region
        $region37: #{tpu_custom_call.1} parent=35 // pred_check
          %p193 = pneg %p84
        $region38: #{tpu_custom_call.1} parent=35 // pred_check_branch
          %195 = sbr.rel (%p193) target = $region40
        $region39: #{tpu_custom_call.1} parent=35 // pred_region
          %s196 = sand.u32 %s69, 1
          %s197 = scalar_lea.sflag [#allocation4], %s196
          %s198 = sand.u32 %s69, 1
          %s199 = smul.addr %s198, 16
          %s200 = scalar_lea.vmem [#allocation5], %s199
          %202 = dma.done %s197, 256
        $region40: #{tpu_custom_call.1} parent=35 // pred_fallthru
          _
      $region36: #{tpu_custom_call.1} parent=5 // pred_fallthru
        _
    $region6: #{tpu_custom_call.1} parent=1 // loop_footer
      %s17 = sadd.s32 1, %s13
    $region7: #{tpu_custom_call.1} parent=1 // loop_footer_branch
      %12 = sbr.rel target = $region3
    $region8: #{tpu_custom_call.1} parent=1 // loop_exit
      _
    %203 = vsyncpa [#allocation3], 1
    %s204 = scalar_lea.sflag [#allocation3], 1
    %205 = vsyncpa %s204, 1
    %206 = vsyncpa [#allocation4], 1
    %s207 = scalar_lea.sflag [#allocation4], 1
    %208 = vsyncpa %s207, 1

</llo_original>
